<compile_context>
chip_gen: v5e
topology: v5e:2x2
jax: 0.10.0
libtpu: 0.0.40
codegen_flags: <defaults>
</compile_context>

<pallas_src>
import functools

import jax
import jax.numpy as jnp
from jax.experimental import pallas as pl
from jax.experimental.pallas import tpu as pltpu


# ----------------------------------------------------------------------------
# Stage 1: streaming global max-pool.
#   x_ref   : (1, C, s_tile)   input block (C on sublanes, spatial on lanes)
#   max_ref : (1, 1, 1, C)     lane-dense resident accumulator / output block
# ----------------------------------------------------------------------------
def _maxpool_kernel(x_ref, max_ref, *, s_tile, S, n_s_per, need_mask):
    p = pl.program_id(0)
    s = pl.program_id(2)

    @pl.when(s == 0)
    def _init():
        max_ref[...] = jnp.full(max_ref.shape, -jnp.inf, max_ref.dtype)

    blk = x_ref[...]                                        # (1, C, s_tile)
    if need_mask:
        # Ragged last tile / overshooting (clamped) tile: mask invalid lanes
        # to -inf so they never win the max.
        start = (p * n_s_per + s) * s_tile
        lane = jax.lax.broadcasted_iota(jnp.int32, blk.shape, 2)
        blk = jnp.where(start + lane < S, blk, jnp.full_like(blk, -jnp.inf))

    blk_max = jnp.max(blk, axis=-1)                         # (1, C)
    cur = max_ref[...]                                      # (1, 1, 1, C)
    max_ref[...] = jnp.maximum(cur, blk_max.reshape(cur.shape))


# ----------------------------------------------------------------------------
# Stage 2: one batched FC on the pooled features (single MXU matmul).
# ----------------------------------------------------------------------------
def _fc_kernel(p_ref, w_ref, b_ref, o_ref):
    h = jnp.dot(p_ref[...].astype(jnp.float32),
                w_ref[...].astype(jnp.float32),
                preferred_element_type=jnp.float32,
                precision=jax.lax.Precision.HIGHEST)
    o_ref[...] = (h + b_ref[...]).astype(o_ref.dtype)


def _pick_s_tile(S, C, itemsize, max_block_bytes):
    """Largest 128-multiple spatial tile whose (1, C, s_tile) block fits
    max_block_bytes; a single full-extent block if the whole S fits."""
    cap = max(128, max_block_bytes // (C * itemsize))
    if S <= cap:
        return S                      # full-extent block (always legal)
    return (cap // 128) * 128


def multi_attention_pool_3(x, w_fc, b_fc, *, max_block_bytes=None):
    """x: (B, C, T, W, H).  w_fc: (C, C) = PyTorch Linear weight transposed
    (in x out).  b_fc: (C,).  Returns dict with 'maxpool_hidden' and 'hidden',
    both (B, C) in x.dtype."""
    B, C, T, W, H = x.shape
    S = T * W * H
    x3 = x.reshape(B, C, S)           # free: collapses trailing dims only
    itemsize = jnp.dtype(x.dtype).itemsize

    # --- generation-aware VMEM budget & block sizing -------------------------
    try:
        phys_vmem = pltpu.get_tpu_info().vmem_capacity_bytes
    except Exception:                 # pragma: no cover - conservative fallback
        phys_vmem = 64 * 1024 * 1024  # v7x-sized assumption
    vmem_limit = int(min((phys_vmem * 3) // 4, 100 * 1024 * 1024))
    if max_block_bytes is None:
        # Double-buffered x block + outputs must stay inside the scoped limit.
        max_block_bytes = min(16 * 1024 * 1024,
                              (vmem_limit - 4 * 1024 * 1024) // 2)

    s_tile = _pick_s_tile(S, C, itemsize, max_block_bytes)
    n_s = pl.cdiv(S, s_tile)

    # Feed both v7x TensorCores even when B == 1: split the spatial reduction
    # over a leading parallel axis and combine the partial maxes afterwards.
    n_split = 2 if (B == 1 and n_s > 1) else 1
    n_s_per = pl.cdiv(n_s, n_split)
    need_mask = (n_s * s_tile != S) or (n_split * n_s_per != n_s)

    if n_split * n_s_per == n_s:
        def x_map(p, b, s):
            return (b, 0, p * n_s_per + s)
    else:
        def x_map(p, b, s):
            return (b, 0, jnp.minimum(p * n_s_per + s, n_s - 1))

    kernel = functools.partial(_maxpool_kernel, s_tile=s_tile, S=S,
                               n_s_per=n_s_per, need_mask=need_mask)

    partial_max = pl.pallas_call(
        kernel,
        out_shape=jax.ShapeDtypeStruct((n_split, B, 1, C), x.dtype),
        grid=(n_split, B, n_s_per),
        in_specs=[pl.BlockSpec((1, C, s_tile), x_map)],
        out_specs=pl.BlockSpec((1, 1, 1, C), lambda p, b, s: (p, b, 0, 0)),
        compiler_params=pltpu.CompilerParams(
            dimension_semantics=("parallel", "parallel", "arbitrary"),
            vmem_limit_bytes=vmem_limit,
        ),
        cost_estimate=pl.CostEstimate(
            flops=int(B) * int(C) * int(S),
            transcendentals=0,
            bytes_accessed=int(B) * int(C) * int(S) * itemsize
                           + n_split * int(B) * int(C) * itemsize,
        ),
    )(x3)

    maxpool_hidden = jnp.max(partial_max, axis=0).reshape(B, C)

    # --- stage 2: batched FC (single (B,C)@(C,C) matmul) ---------------------
    w2 = w_fc.astype(jnp.float32)
    b2 = b_fc.reshape(1, C).astype(jnp.float32)
    hidden = pl.pallas_call(
        _fc_kernel,
        out_shape=jax.ShapeDtypeStruct((B, C), x.dtype),
        grid=(1,),
        in_specs=[pl.BlockSpec((B, C), lambda i: (0, 0)),
                  pl.BlockSpec((C, C), lambda i: (0, 0)),
                  pl.BlockSpec((1, C), lambda i: (0, 0))],
        out_specs=pl.BlockSpec((B, C), lambda i: (0, 0)),
        compiler_params=pltpu.CompilerParams(vmem_limit_bytes=vmem_limit),
    )(maxpool_hidden, w2, b2)

    return {'maxpool_hidden': maxpool_hidden, 'hidden': hidden}


# ----------------------------------------------------------------------------
# Pure-JAX reference (matches the PyTorch module's forward).
# ----------------------------------------------------------------------------
def reference(x, w_fc, b_fc):
    B, C = x.shape[:2]
    maxh = jnp.max(x.reshape(B, C, -1), axis=-1)
    hid = jnp.dot(maxh.astype(jnp.float32), w_fc.astype(jnp.float32),
                  precision=jax.lax.Precision.HIGHEST) \
          + b_fc.reshape(1, -1).astype(jnp.float32)
    return {'maxpool_hidden': maxh, 'hidden': hid}


if __name__ == "__main__":
    key = jax.random.PRNGKey(0)

    def check(B, C, T, W, H, dtype, max_block_bytes, tol):
        kx, kw, kb = jax.random.split(jax.random.fold_in(key, B * 1000 + T * W * H), 3)
        x = jax.random.normal(kx, (B, C, T, W, H), jnp.float32).astype(dtype)
        w = jax.random.normal(kw, (C, C), jnp.float32) * 0.05
        b = jax.random.normal(kb, (C,), jnp.float32) * 0.05
        out = jax.block_until_ready(
            multi_attention_pool_3(x, w, b, max_block_bytes=max_block_bytes))
        ref = reference(x, w, b)
        for k in ('maxpool_hidden', 'hidden'):
            a = out[k].astype(jnp.float32)
            r = ref[k].astype(jnp.float32)
            assert a.shape == r.shape, (k, a.shape, r.shape)
            assert jnp.allclose(a, r, rtol=tol, atol=tol), \
                (k, float(jnp.max(jnp.abs(a - r))))

    # Multi-step aligned reduction (init / accumulate path).
    check(B=2, C=128, T=4, W=16, H=16, dtype=jnp.float32,
          max_block_bytes=128 * 1024, tol=1e-4)
    # Ragged spatial extent (exercises -inf masking of the last tile).
    check(B=2, C=128, T=3, W=10, H=11, dtype=jnp.float32,
          max_block_bytes=128 * 1024, tol=1e-4)
    # B == 1: spatial split across a leading parallel axis (v7x both-TC path),
    # including a fully-masked overshooting trailing block.
    check(B=1, C=128, T=7, W=10, H=10, dtype=jnp.float32,
          max_block_bytes=128 * 1024, tol=1e-4)
    # bf16 streaming path (halves HBM traffic; max is exact in bf16).
    check(B=2, C=128, T=4, W=16, H=16, dtype=jnp.bfloat16,
          max_block_bytes=128 * 1024, tol=2e-2)
    # Default (large-block, generation-aware) sizing path.
    check(B=2, C=128, T=4, W=16, H=16, dtype=jnp.float32,
          max_block_bytes=None, tol=1e-4)

    print("KERNEL_OK")
</pallas_src>

<mosaic_0001>
module attributes {stable_mosaic.version = 11 : i64} {
  func.func @_maxpool_kernel(%arg0: i32, %arg1: i32, %arg2: i32, %arg3: memref<1x128x256xf32, #tpu.memory_space<vmem>>, %arg4: memref<1x1x1x128xf32, #tpu.memory_space<vmem>>) attributes {dimension_semantics = [#tpu.dimension_semantics<parallel>, #tpu.dimension_semantics<parallel>, #tpu.dimension_semantics<arbitrary>], iteration_bounds = array<i64: 1, 2, 4>, scalar_prefetch = 0 : i64, scratch_operands = 0 : i64, tpu.core_type = #tpu.core_type<tc>, window_params = [{transform_indices = @transform_0, window_bounds = array<i64: 1, 128, 256>}, {transform_indices = @transform_1, window_bounds = array<i64: 1, 1, 1, 128>}]} {
    %c0_i32 = arith.constant 0 : i32
    %0 = arith.cmpi eq, %arg2, %c0_i32 : i32
    %1 = arith.extui %0 : i1 to i32
    %c0_i32_0 = arith.constant 0 : i32
    %2 = arith.cmpi ne, %1, %c0_i32_0 : i32
    scf.if %2 {
      %cst_11 = arith.constant 0xFF800000 : f32
      %9 = vector.broadcast %cst_11 : f32 to vector<1x1x1x128xf32>
      %c0_12 = arith.constant 0 : index
      %c0_13 = arith.constant 0 : index
      %c0_14 = arith.constant 0 : index
      %c0_15 = arith.constant 0 : index
      %10 = vector.load %arg4[%c0_12, %c0_13, %c0_14, %c0_15] : memref<1x1x1x128xf32, #tpu.memory_space<vmem>>, vector<1x1x1x128xf32>
      tpu.vector_store %arg4[%c0_12, %c0_13, %c0_14, %c0_15], %9 {strides = array<i32>} : memref<1x1x1x128xf32, #tpu.memory_space<vmem>>, vector<1x1x1x128xf32>,
    } else {
    }
    %c0 = arith.constant 0 : index
    %c0_1 = arith.constant 0 : index
    %c0_2 = arith.constant 0 : index
    %3 = vector.load %arg3[%c0, %c0_1, %c0_2] : memref<1x128x256xf32, #tpu.memory_space<vmem>>, vector<1x128x256xf32>
    %cst = arith.constant dense<0xFF800000> : vector<1x128xf32>
    %4 = vector.multi_reduction <maximumf>, %3, %cst [2] : vector<1x128x256xf32> to vector<1x128xf32>
    %c0_3 = arith.constant 0 : index
    %c0_4 = arith.constant 0 : index
    %c0_5 = arith.constant 0 : index
    %c0_6 = arith.constant 0 : index
    %5 = vector.load %arg4[%c0_3, %c0_4, %c0_5, %c0_6] : memref<1x1x1x128xf32, #tpu.memory_space<vmem>>, vector<1x1x1x128xf32>
    %6 = vector.shape_cast %4 : vector<1x128xf32> to vector<1x1x1x128xf32>
    %7 = arith.maximumf %5, %6 : vector<1x1x1x128xf32>
    %c0_7 = arith.constant 0 : index
    %c0_8 = arith.constant 0 : index
    %c0_9 = arith.constant 0 : index
    %c0_10 = arith.constant 0 : index
    %8 = vector.load %arg4[%c0_7, %c0_8, %c0_9, %c0_10] : memref<1x1x1x128xf32, #tpu.memory_space<vmem>>, vector<1x1x1x128xf32>
    tpu.vector_store %arg4[%c0_7, %c0_8, %c0_9, %c0_10], %7 {strides = array<i32>} : memref<1x1x1x128xf32, #tpu.memory_space<vmem>>, vector<1x1x1x128xf32>,
    return
  }
  func.func @transform_0(%arg0: i32, %arg1: i32, %arg2: i32) -> (i32, i32, i32) {
    %c4_i32 = arith.constant 4 : i32
    %0 = arith.muli %arg0, %c4_i32 : i32
    %1 = arith.addi %0, %arg2 : i32
    %c0_i32 = arith.constant 0 : i32
    %c0_i32_0 = arith.constant 0 : i32
    return %arg1, %c0_i32, %1 : i32, i32, i32
  }
  func.func @transform_1(%arg0: i32, %arg1: i32, %arg2: i32) -> (i32, i32, i32, i32) {
    %c0_i32 = arith.constant 0 : i32
    %c0_i32_0 = arith.constant 0 : i32
    %c0_i32_1 = arith.constant 0 : i32
    return %arg0, %arg1, %c0_i32, %c0_i32_0 : i32, i32, i32, i32
  }
}

</mosaic_0001>

<llo_original>
// kernel: tpu_custom_call.1
$region0: #{tpu_custom_call.1}
  #allocation0 [shape = 'u32[]', space=smem, size = 0x4, offset = 0x4, fixed_abs, tag = 'smem constant byte address 0x4 - core index']
  #allocation1 [shape = 'u32[72,128]{1,0:T(1,128)}', space=vmem, size = 0x9000, scoped, tag = 'internal scratch']
  %s0 = inlined_call_operand.hbm [shape: f32[2,128,1024], index: 0, kind: input, shape index: {}]
  %s1 = inlined_call_operand.hbm [shape: f32[1,2,1,128], index: 1, kind: output, shape index: {}]
  %s2 = sld [smem:[#allocation0]]
  $region45: #{tpu_custom_call.1} parent=0
    _
  %s4 = ssub.s32 1, %s2
  %s5 = scalar_select 0, %s4, %s2
  $region1: #{tpu_custom_call.1} parent=0
    #allocation2 [shape = 'u8[262144]{0}', space=vmem, size = 0x40000, scoped, tag = 'input window, operand 0']
    #allocation3 [shape = 's32[2]{0}', space=sflag, size = 0x8, scoped, tag = 'scoped memory for tpu_custom_call.1']
    #allocation4 [shape = 's32[2]{0}', space=sflag, size = 0x8, scoped, tag = 'scoped memory for tpu_custom_call.1']
    #allocation5 [shape = 'u8[1024]{0}', space=vmem, size = 0x400, scoped, tag = 'output window, operand 0']
    %6 = vsyncpa [#allocation3], 0
    %s7 = scalar_lea.sflag [#allocation3], 1
    %8 = vsyncpa %s7, 0
    %9 = vsyncpa [#allocation4], 0
    %s10 = scalar_lea.sflag [#allocation4], 1
    %11 = vsyncpa %s10, 0
    loop: start=0, step=1, limit=10
    $region2: #{tpu_custom_call.1} parent=1 // loop_pre_header
      _
    $region3: #{tpu_custom_call.1} parent=1 // loop_header
      %s13 = sphi 0, %s17
      %p14 = scmp.ge.s32.totalorder %s13, 10
      %s20 = sphi 0, %s39
      %s21 = sphi 0, %s35
      %s22 = sphi 0, %s31
      %s23 = sphi 0, %s20
      %s24 = sphi 0, %s21
      %s25 = sphi 0, %s22
      %s26 = sphi 0, %s23
      %s27 = sphi 0, %s24
      %s28 = sphi 0, %s25
      %s48 = sphi 0, %s50
      %s51 = sphi 0, %s48
      %s52 = sphi 0, %s51
      %s68 = sphi 0, %s52
      %s76 = sphi 0, %s78
      %s79 = sphi 0, %s76
      %s80 = sphi 0, %s79
      %s96 = sphi 0, %s80
    $region4: #{tpu_custom_call.1} parent=1 // loop_header_branch
      %16 = sbr.rel (%p14) target = $region8
    $region5: #{tpu_custom_call.1} parent=1 // loop_body
      %s18 = ssub.s32 %s13, 1
      %s19 = ssub.s32 %s13, 2
      %s29 = sadd.s32 1, %s22
      %p30 = scmp.ge.s32.totalorder %s29, 4
      %s31 = scalar_select %p30, 0, %s29
      %s32 = sadd.s32 1, %s21
      %s33 = scalar_select %p30, %s32, %s21
      %p34 = scmp.ge.s32.totalorder %s33, 2
      %s35 = scalar_select %p34, 0, %s33
      %s36 = sadd.s32 1, %s20
      %s37 = scalar_select %p34, %s36, %s20
      %p38 = scmp.ge.s32.totalorder %s37, 1
      %s39 = scalar_select %p38, 0, %s37
      %s40 = smul.u32 %s20, 4
      %s41 = sadd.s32 %s40, %s22
      %s42 = smul.u32 %s39, 4
      %s43 = sadd.s32 %s42, %s31
      %s44 = ssub.s32 %s21, %s35
      %s45 = ssub.s32 %s41, %s43
      %s46 = sor.u32 %s44, %s45
      %p47 = scmp.eq.s32.totalorder %s46, 0
      %s49 = sadd.s32 %s48, 1
      %s50 = scalar_select %p47, %s48, %s49
      %p53 = pneg %p47
      %p54 = scmp.eq.s32.totalorder %s13, 7
      %p55 = por %p53, %p54
      %p56 = scmp.ne.s32.totalorder %s48, %s51
      %p57 = scmp.eq.s32.totalorder %s13, 0
      %p58 = por %p56, %p57
      %p59 = scmp.ne.s32.totalorder %s48, %s51
      %p60 = scmp.eq.s32.totalorder %s18, 7
      %p61 = por %p59, %p60
      %p62 = scmp.ne.s32.totalorder %s51, %s52
      %p63 = scmp.eq.s32.totalorder %s18, 0
      %p64 = por %p62, %p63
      %p65 = scmp.ne.s32.totalorder %s51, %s52
      %p66 = scmp.eq.s32.totalorder %s19, 7
      %p67 = por %p65, %p66
      %p69 = scmp.ne.s32.totalorder %s52, %s68
      %p70 = scmp.eq.s32.totalorder %s19, 0
      %p71 = por %p69, %p70
      %s72 = ssub.s32 %s20, %s39
      %s73 = ssub.s32 %s21, %s35
      %s74 = sor.u32 %s72, %s73
      %p75 = scmp.eq.s32.totalorder %s74, 0
      %s77 = sadd.s32 %s76, 1
      %s78 = scalar_select %p75, %s76, %s77
      %p81 = pneg %p75
      %p82 = scmp.eq.s32.totalorder %s13, 7
      %p83 = por %p81, %p82
      %p84 = scmp.ne.s32.totalorder %s76, %s79
      %p85 = scmp.eq.s32.totalorder %s13, 0
      %p86 = por %p84, %p85
      %p87 = scmp.ne.s32.totalorder %s76, %s79
      %p88 = scmp.eq.s32.totalorder %s18, 7
      %p89 = por %p87, %p88
      %p90 = scmp.ne.s32.totalorder %s79, %s80
      %p91 = scmp.eq.s32.totalorder %s18, 0
      %p92 = por %p90, %p91
      %p93 = scmp.ne.s32.totalorder %s79, %s80
      %p94 = scmp.eq.s32.totalorder %s19, 7
      %p95 = por %p93, %p94
      %p97 = scmp.ne.s32.totalorder %s80, %s96
      %p98 = scmp.eq.s32.totalorder %s19, 0
      %p99 = por %p97, %p98
      %p100 = scmp.le.s32.totalorder 1, %s13
      %p101 = scmp.lt.s32.totalorder %s13, 9
      %p102 = pnand %p100, %p101
      %p103 = pneg %p102
      // Predicated region
      $region9: #{tpu_custom_call.1} parent=5 // pred_check
        _
      $region10: #{tpu_custom_call.1} parent=5 // pred_check_branch
        %105 = sbr.rel (%p102) target = $region12
      $region11: #{tpu_custom_call.1} parent=5 // pred_region
        %s106 = ssub.s32 %s13, 1
      $region12: #{tpu_custom_call.1} parent=5 // pred_fallthru
        _
      %p107 = scmp.lt.s32.totalorder %s13, 8
      // Predicated region
      $region13: #{tpu_custom_call.1} parent=5 // pred_check
        %p108 = pneg %p107
      $region14: #{tpu_custom_call.1} parent=5 // pred_check_branch
        %110 = sbr.rel (%p108) target = $region16
      $region15: #{tpu_custom_call.1} parent=5 // pred_region
        // Predicated region
        $region17: #{tpu_custom_call.1} parent=15 // pred_check
          %p111 = pneg %p58
        $region18: #{tpu_custom_call.1} parent=15 // pred_check_branch
          %113 = sbr.rel (%p111) target = $region20
        $region19: #{tpu_custom_call.1} parent=15 // pred_region
          %s114 = sand.u32 %s48, 1
          %s115 = scalar_lea.sflag [#allocation3], %s114
          %s116 = sand.u32 %s48, 1
          %s117 = smul.addr %s116, 256
          %s118 = scalar_lea.vmem [#allocation2], %s117
          %s119 = smul.u32 %s20, 4
          %s120 = sadd.s32 %s119, %s22
          %s121 = smul.u32 2, %s120
          %123 = vsyncadd %s115, 0
          %s124 = smul.addr %s21, 128
          %s125 = sadd.s32 %s121, %s124
          %s126 = smul.addr %s125, 8
          %s127 = scalar_lea.hbm %s0, %s126
          %s128 = sshll.u32 %s127, 4
          %s129 = int_to_ptr.hbm [resolvable:$true] %s128
          %s130 = sshll.u32 %s118, 4
          %s131 = int_to_ptr.vmem [resolvable:$true] %s130
          %136 = dma.hbm_to_vmem [thread:$0]  %s129, 4096, %s131, %s115, 1024, 256, 16
        $region20: #{tpu_custom_call.1} parent=15 // pred_fallthru
          _
      $region16: #{tpu_custom_call.1} parent=5 // pred_fallthru
        _
      %p137 = scmp.le.s32.totalorder 1, %s13
      %p138 = scmp.lt.s32.totalorder %s13, 9
      %p139 = pnand %p137, %p138
      %p140 = pneg %p139
      // Predicated region
      $region21: #{tpu_custom_call.1} parent=5 // pred_check
        _
      $region22: #{tpu_custom_call.1} parent=5 // pred_check_branch
        %142 = sbr.rel (%p139) target = $region24
      $region23: #{tpu_custom_call.1} parent=5 // pred_region
        %s143 = ssub.s32 %s13, 1
        %s144 = sand.u32 %s51, 1
        %s145 = scalar_lea.sflag [#allocation3], %s144
        %s146 = sand.u32 %s51, 1
        %s147 = smul.addr %s146, 256
        %s148 = scalar_lea.vmem [#allocation2], %s147
        // Predicated region
        $region25: #{tpu_custom_call.1} parent=23 // pred_check
          %p149 = pneg %p64
        $region26: #{tpu_custom_call.1} parent=23 // pred_check_branch
          %151 = sbr.rel (%p149) target = $region28
        $region27: #{tpu_custom_call.1} parent=23 // pred_region
          %153 = dma.done %s145, 4096
        $region28: #{tpu_custom_call.1} parent=23 // pred_fallthru
          _
        %s154 = sand.u32 %s51, 1
        %s155 = scalar_lea.sflag [#allocation3], %s154
        %s156 = sand.u32 %s51, 1
        %s157 = smul.addr %s156, 256
        %s158 = scalar_lea.vmem [#allocation2], %s157
        %p159 = pneg %p64
        %p160 = pneg %p61
        %p161 = pneg %p92
        %p162 = pneg %p89
        %s163 = sand.u32 %s79, 1
        %s164 = scalar_lea.sflag [#allocation4], %s163
        %s165 = sand.u32 %s79, 1
        %s166 = scalar_lea.vmem [#allocation5], %s165
        %s167 = smul.u32 %s23, 4
        %s168 = sadd.s32 %s167, %s25
        %s169 = smul.u32 2, %s168
        %p170 = scmp.eq.s32.totalorder %s25, 0
        // Predicated region
        $region29: #{tpu_custom_call.1} parent=23 // pred_check
          %p171 = pneg %p170
        $region30: #{tpu_custom_call.1} parent=23 // pred_check_branch
          %173 = sbr.rel (%p171) target = $region32
        $region31: #{tpu_custom_call.1} parent=23 // pred_region
          %174 = vst [vmem:[%s166] sm:$0x1] -inf
        $region32: #{tpu_custom_call.1} parent=23 // pred_fallthru
          _
        %v175 = vld [vmem:[%s148] sm:$0xff]
        %v176 = vld [vmem:[%s148 + $0x8] sm:$0xff]
        %v177 = vld [vmem:[%s148 + $0x10] sm:$0xff]
        %v178 = vld [vmem:[%s148 + $0x18] sm:$0xff]
        %v179 = vld [vmem:[%s148 + $0x20] sm:$0xff]
        %v180 = vld [vmem:[%s148 + $0x28] sm:$0xff]
        %v181 = vld [vmem:[%s148 + $0x30] sm:$0xff]
        %v182 = vld [vmem:[%s148 + $0x38] sm:$0xff]
        %v183 = vld [vmem:[%s148 + $0x40] sm:$0xff]
        %v184 = vld [vmem:[%s148 + $0x48] sm:$0xff]
        %v185 = vld [vmem:[%s148 + $0x50] sm:$0xff]
        %v186 = vld [vmem:[%s148 + $0x58] sm:$0xff]
        %v187 = vld [vmem:[%s148 + $0x60] sm:$0xff]
        %v188 = vld [vmem:[%s148 + $0x68] sm:$0xff]
        %v189 = vld [vmem:[%s148 + $0x70] sm:$0xff]
        %v190 = vld [vmem:[%s148 + $0x78] sm:$0xff]
        %v191 = vld [vmem:[%s148 + $0x80] sm:$0xff]
        %v192 = vld [vmem:[%s148 + $0x88] sm:$0xff]
        %v193 = vld [vmem:[%s148 + $0x90] sm:$0xff]
        %v194 = vld [vmem:[%s148 + $0x98] sm:$0xff]
        %v195 = vld [vmem:[%s148 + $0xa0] sm:$0xff]
        %v196 = vld [vmem:[%s148 + $0xa8] sm:$0xff]
        %v197 = vld [vmem:[%s148 + $0xb0] sm:$0xff]
        %v198 = vld [vmem:[%s148 + $0xb8] sm:$0xff]
        %v199 = vld [vmem:[%s148 + $0xc0] sm:$0xff]
        %v200 = vld [vmem:[%s148 + $0xc8] sm:$0xff]
        %v201 = vld [vmem:[%s148 + $0xd0] sm:$0xff]
        %v202 = vld [vmem:[%s148 + $0xd8] sm:$0xff]
        %v203 = vld [vmem:[%s148 + $0xe0] sm:$0xff]
        %v204 = vld [vmem:[%s148 + $0xe8] sm:$0xff]
        %v205 = vld [vmem:[%s148 + $0xf0] sm:$0xff]
        %v206 = vld [vmem:[%s148 + $0xf8] sm:$0xff]
        %v207 = vmax.f32 %v175, %v176
        %208 = vmax.xlane.f32.xlu0 %v207
        %v209 = vpop.xlane.xlu0 %208
        %v210 = vmax.f32 %v177, %v178
        %211 = vmax.xlane.f32.xlu0 %v210
        %v212 = vpop.xlane.xlu0 %211
        %v213 = vmax.f32 %v179, %v180
        %214 = vmax.xlane.f32.xlu0 %v213
        %v215 = vpop.xlane.xlu0 %214
        %v216 = vmax.f32 %v181, %v182
        %217 = vmax.xlane.f32.xlu0 %v216
        %v218 = vpop.xlane.xlu0 %217
        %v219 = vmax.f32 %v183, %v184
        %220 = vmax.xlane.f32.xlu0 %v219
        %v221 = vpop.xlane.xlu0 %220
        %v222 = vmax.f32 %v185, %v186
        %223 = vmax.xlane.f32.xlu0 %v222
        %v224 = vpop.xlane.xlu0 %223
        %v225 = vmax.f32 %v187, %v188
        %226 = vmax.xlane.f32.xlu0 %v225
        %v227 = vpop.xlane.xlu0 %226
        %v228 = vmax.f32 %v189, %v190
        %229 = vmax.xlane.f32.xlu0 %v228
        %v230 = vpop.xlane.xlu0 %229
        %v231 = vmax.f32 %v191, %v192
        %232 = vmax.xlane.f32.xlu0 %v231
        %v233 = vpop.xlane.xlu0 %232
        %v234 = vmax.f32 %v193, %v194
        %235 = vmax.xlane.f32.xlu0 %v234
        %v236 = vpop.xlane.xlu0 %235
        %v237 = vmax.f32 %v195, %v196
        %238 = vmax.xlane.f32.xlu0 %v237
        %v239 = vpop.xlane.xlu0 %238
        %v240 = vmax.f32 %v197, %v198
        %241 = vmax.xlane.f32.xlu0 %v240
        %v242 = vpop.xlane.xlu0 %241
        %v243 = vmax.f32 %v199, %v200
        %244 = vmax.xlane.f32.xlu0 %v243
        %v245 = vpop.xlane.xlu0 %244
        %v246 = vmax.f32 %v201, %v202
        %247 = vmax.xlane.f32.xlu0 %v246
        %v248 = vpop.xlane.xlu0 %247
        %v249 = vmax.f32 %v203, %v204
        %250 = vmax.xlane.f32.xlu0 %v249
        %v251 = vpop.xlane.xlu0 %250
        %v252 = vmax.f32 %v205, %v206
        %253 = vmax.xlane.f32.xlu0 %v252
        %v254 = vpop.xlane.xlu0 %253
        %v255 = vld [vmem:[%s166] sm:$0x1]
        %v272 = vperm.slane %v209, 0
        %v273 = vperm.slane %v209, 1
        %v274 = vperm.slane %v209, 2
        %v275 = vperm.slane %v209, 3
        %v276 = vperm.slane %v209, 4
        %v277 = vperm.slane %v209, 5
        %v278 = vperm.slane %v209, 6
        %v279 = vperm.slane %v209, 7
        %v280 = vperm.slane %v212, 0
        %v281 = vperm.slane %v212, 1
        %v282 = vperm.slane %v212, 2
        %v283 = vperm.slane %v212, 3
        %v284 = vperm.slane %v212, 4
        %v285 = vperm.slane %v212, 5
        %v286 = vperm.slane %v212, 6
        %v287 = vperm.slane %v212, 7
        %v288 = vperm.slane %v215, 0
        %v289 = vperm.slane %v215, 1
        %v290 = vperm.slane %v215, 2
        %v291 = vperm.slane %v215, 3
        %v292 = vperm.slane %v215, 4
        %v293 = vperm.slane %v215, 5
        %v294 = vperm.slane %v215, 6
        %v295 = vperm.slane %v215, 7
        %v296 = vperm.slane %v218, 0
        %v297 = vperm.slane %v218, 1
        %v298 = vperm.slane %v218, 2
        %v299 = vperm.slane %v218, 3
        %v300 = vperm.slane %v218, 4
        %v301 = vperm.slane %v218, 5
        %v302 = vperm.slane %v218, 6
        %v303 = vperm.slane %v218, 7
        %v304 = vperm.slane %v221, 0
        %v305 = vperm.slane %v221, 1
        %v306 = vperm.slane %v221, 2
        %v307 = vperm.slane %v221, 3
        %v308 = vperm.slane %v221, 4
        %v309 = vperm.slane %v221, 5
        %v310 = vperm.slane %v221, 6
        %v311 = vperm.slane %v221, 7
        %v312 = vperm.slane %v224, 0
        %v313 = vperm.slane %v224, 1
        %v314 = vperm.slane %v224, 2
        %v315 = vperm.slane %v224, 3
        %v316 = vperm.slane %v224, 4
        %v317 = vperm.slane %v224, 5
        %v318 = vperm.slane %v224, 6
        %v319 = vperm.slane %v224, 7
        %v320 = vperm.slane %v227, 0
        %v321 = vperm.slane %v227, 1
        %v322 = vperm.slane %v227, 2
        %v323 = vperm.slane %v227, 3
        %v324 = vperm.slane %v227, 4
        %v325 = vperm.slane %v227, 5
        %v326 = vperm.slane %v227, 6
        %v327 = vperm.slane %v227, 7
        %v328 = vperm.slane %v230, 0
        %v329 = vperm.slane %v230, 1
        %v330 = vperm.slane %v230, 2
        %v331 = vperm.slane %v230, 3
        %v332 = vperm.slane %v230, 4
        %v333 = vperm.slane %v230, 5
        %v334 = vperm.slane %v230, 6
        %v335 = vperm.slane %v230, 7
        %v336 = vperm.slane %v233, 0
        %v337 = vperm.slane %v233, 1
        %v338 = vperm.slane %v233, 2
        %v339 = vperm.slane %v233, 3
        %v340 = vperm.slane %v233, 4
        %v341 = vperm.slane %v233, 5
        %v342 = vperm.slane %v233, 6
        %v343 = vperm.slane %v233, 7
        %v344 = vperm.slane %v236, 0
        %v345 = vperm.slane %v236, 1
        %v346 = vperm.slane %v236, 2
        %v347 = vperm.slane %v236, 3
        %v348 = vperm.slane %v236, 4
        %v349 = vperm.slane %v236, 5
        %v350 = vperm.slane %v236, 6
        %v351 = vperm.slane %v236, 7
        %v352 = vperm.slane %v239, 0
        %v353 = vperm.slane %v239, 1
        %v354 = vperm.slane %v239, 2
        %v355 = vperm.slane %v239, 3
        %v356 = vperm.slane %v239, 4
        %v357 = vperm.slane %v239, 5
        %v358 = vperm.slane %v239, 6
        %v359 = vperm.slane %v239, 7
        %v360 = vperm.slane %v242, 0
        %v361 = vperm.slane %v242, 1
        %v362 = vperm.slane %v242, 2
        %v363 = vperm.slane %v242, 3
        %v364 = vperm.slane %v242, 4
        %v365 = vperm.slane %v242, 5
        %v366 = vperm.slane %v242, 6
        %v367 = vperm.slane %v242, 7
        %v368 = vperm.slane %v245, 0
        %v369 = vperm.slane %v245, 1
        %v370 = vperm.slane %v245, 2
        %v371 = vperm.slane %v245, 3
        %v372 = vperm.slane %v245, 4
        %v373 = vperm.slane %v245, 5
        %v374 = vperm.slane %v245, 6
        %v375 = vperm.slane %v245, 7
        %v376 = vperm.slane %v248, 0
        %v377 = vperm.slane %v248, 1
        %v378 = vperm.slane %v248, 2
        %v379 = vperm.slane %v248, 3
        %v380 = vperm.slane %v248, 4
        %v381 = vperm.slane %v248, 5
        %v382 = vperm.slane %v248, 6
        %v383 = vperm.slane %v248, 7
        %v384 = vperm.slane %v251, 0
        %v385 = vperm.slane %v251, 1
        %v386 = vperm.slane %v251, 2
        %v387 = vperm.slane %v251, 3
        %v388 = vperm.slane %v251, 4
        %v389 = vperm.slane %v251, 5
        %v390 = vperm.slane %v251, 6
        %v391 = vperm.slane %v251, 7
        %v392 = vperm.slane %v254, 0
        %v393 = vperm.slane %v254, 1
        %v394 = vperm.slane %v254, 2
        %v395 = vperm.slane %v254, 3
        %v396 = vperm.slane %v254, 4
        %v397 = vperm.slane %v254, 5
        %v398 = vperm.slane %v254, 6
        %v399 = vperm.slane %v254, 7
        %400 = vst [vmem:[#allocation1] ss:$9 sm:$0xff] %v272
        %s401 = scalar_lea.vmem [#allocation1], 1
        %402 = vst [vmem:[%s401] ss:$9 sm:$0xff] %v273
        %s403 = scalar_lea.vmem [#allocation1], 2
        %404 = vst [vmem:[%s403] ss:$9 sm:$0xff] %v274
        %s405 = scalar_lea.vmem [#allocation1], 3
        %406 = vst [vmem:[%s405] ss:$9 sm:$0xff] %v275
        %s407 = scalar_lea.vmem [#allocation1], 4
        %408 = vst [vmem:[%s407] ss:$9 sm:$0xff] %v276
        %s409 = scalar_lea.vmem [#allocation1], 5
        %410 = vst [vmem:[%s409] ss:$9 sm:$0xff] %v277
        %s411 = scalar_lea.vmem [#allocation1], 6
        %412 = vst [vmem:[%s411] ss:$9 sm:$0xff] %v278
        %s413 = scalar_lea.vmem [#allocation1], 7
        %414 = vst [vmem:[%s413] ss:$9 sm:$0xff] %v279
        %v415 = vld [vmem:[#allocation1] sm:$0xff]
        %416 = vst [vmem:[#allocation1] ss:$9 sm:$0xff] %v280
        %417 = vst [vmem:[%s401] ss:$9 sm:$0xff] %v281
        %418 = vst [vmem:[%s403] ss:$9 sm:$0xff] %v282
        %419 = vst [vmem:[%s405] ss:$9 sm:$0xff] %v283
        %420 = vst [vmem:[%s407] ss:$9 sm:$0xff] %v284
        %421 = vst [vmem:[%s409] ss:$9 sm:$0xff] %v285
        %422 = vst [vmem:[%s411] ss:$9 sm:$0xff] %v286
        %423 = vst [vmem:[%s413] ss:$9 sm:$0xff] %v287
        %v424 = vld [vmem:[#allocation1] sm:$0xff]
        %425 = vst [vmem:[#allocation1] ss:$9 sm:$0xff] %v288
        %426 = vst [vmem:[%s401] ss:$9 sm:$0xff] %v289
        %427 = vst [vmem:[%s403] ss:$9 sm:$0xff] %v290
        %428 = vst [vmem:[%s405] ss:$9 sm:$0xff] %v291
        %429 = vst [vmem:[%s407] ss:$9 sm:$0xff] %v292
        %430 = vst [vmem:[%s409] ss:$9 sm:$0xff] %v293
        %431 = vst [vmem:[%s411] ss:$9 sm:$0xff] %v294
        %432 = vst [vmem:[%s413] ss:$9 sm:$0xff] %v295
        %v433 = vld [vmem:[#allocation1] sm:$0xff]
        %434 = vst [vmem:[#allocation1] ss:$9 sm:$0xff] %v296
        %435 = vst [vmem:[%s401] ss:$9 sm:$0xff] %v297
        %436 = vst [vmem:[%s403] ss:$9 sm:$0xff] %v298
        %437 = vst [vmem:[%s405] ss:$9 sm:$0xff] %v299
        %438 = vst [vmem:[%s407] ss:$9 sm:$0xff] %v300
        %439 = vst [vmem:[%s409] ss:$9 sm:$0xff] %v301
        %440 = vst [vmem:[%s411] ss:$9 sm:$0xff] %v302
        %441 = vst [vmem:[%s413] ss:$9 sm:$0xff] %v303
        %v442 = vld [vmem:[#allocation1] sm:$0xff]
        %443 = vst [vmem:[#allocation1] ss:$9 sm:$0xff] %v304
        %444 = vst [vmem:[%s401] ss:$9 sm:$0xff] %v305
        %445 = vst [vmem:[%s403] ss:$9 sm:$0xff] %v306
        %446 = vst [vmem:[%s405] ss:$9 sm:$0xff] %v307
        %447 = vst [vmem:[%s407] ss:$9 sm:$0xff] %v308
        %448 = vst [vmem:[%s409] ss:$9 sm:$0xff] %v309
        %449 = vst [vmem:[%s411] ss:$9 sm:$0xff] %v310
        %450 = vst [vmem:[%s413] ss:$9 sm:$0xff] %v311
        %v451 = vld [vmem:[#allocation1] sm:$0xff]
        %452 = vst [vmem:[#allocation1] ss:$9 sm:$0xff] %v312
        %453 = vst [vmem:[%s401] ss:$9 sm:$0xff] %v313
        %454 = vst [vmem:[%s403] ss:$9 sm:$0xff] %v314
        %455 = vst [vmem:[%s405] ss:$9 sm:$0xff] %v315
        %456 = vst [vmem:[%s407] ss:$9 sm:$0xff] %v316
        %457 = vst [vmem:[%s409] ss:$9 sm:$0xff] %v317
        %458 = vst [vmem:[%s411] ss:$9 sm:$0xff] %v318
        %459 = vst [vmem:[%s413] ss:$9 sm:$0xff] %v319
        %v460 = vld [vmem:[#allocation1] sm:$0xff]
        %461 = vst [vmem:[#allocation1] ss:$9 sm:$0xff] %v320
        %462 = vst [vmem:[%s401] ss:$9 sm:$0xff] %v321
        %463 = vst [vmem:[%s403] ss:$9 sm:$0xff] %v322
        %464 = vst [vmem:[%s405] ss:$9 sm:$0xff] %v323
        %465 = vst [vmem:[%s407] ss:$9 sm:$0xff] %v324
        %466 = vst [vmem:[%s409] ss:$9 sm:$0xff] %v325
        %467 = vst [vmem:[%s411] ss:$9 sm:$0xff] %v326
        %468 = vst [vmem:[%s413] ss:$9 sm:$0xff] %v327
        %v469 = vld [vmem:[#allocation1] sm:$0xff]
        %470 = vst [vmem:[#allocation1] ss:$9 sm:$0xff] %v328
        %471 = vst [vmem:[%s401] ss:$9 sm:$0xff] %v329
        %472 = vst [vmem:[%s403] ss:$9 sm:$0xff] %v330
        %473 = vst [vmem:[%s405] ss:$9 sm:$0xff] %v331
        %474 = vst [vmem:[%s407] ss:$9 sm:$0xff] %v332
        %475 = vst [vmem:[%s409] ss:$9 sm:$0xff] %v333
        %476 = vst [vmem:[%s411] ss:$9 sm:$0xff] %v334
        %477 = vst [vmem:[%s413] ss:$9 sm:$0xff] %v335
        %v478 = vld [vmem:[#allocation1] sm:$0xff]
        %479 = vst [vmem:[#allocation1] ss:$9 sm:$0xff] %v336
        %480 = vst [vmem:[%s401] ss:$9 sm:$0xff] %v337
        %481 = vst [vmem:[%s403] ss:$9 sm:$0xff] %v338
        %482 = vst [vmem:[%s405] ss:$9 sm:$0xff] %v339
        %483 = vst [vmem:[%s407] ss:$9 sm:$0xff] %v340
        %484 = vst [vmem:[%s409] ss:$9 sm:$0xff] %v341
        %485 = vst [vmem:[%s411] ss:$9 sm:$0xff] %v342
        %486 = vst [vmem:[%s413] ss:$9 sm:$0xff] %v343
        %v487 = vld [vmem:[#allocation1] sm:$0xff]
        %488 = vst [vmem:[#allocation1] ss:$9 sm:$0xff] %v344
        %489 = vst [vmem:[%s401] ss:$9 sm:$0xff] %v345
        %490 = vst [vmem:[%s403] ss:$9 sm:$0xff] %v346
        %491 = vst [vmem:[%s405] ss:$9 sm:$0xff] %v347
        %492 = vst [vmem:[%s407] ss:$9 sm:$0xff] %v348
        %493 = vst [vmem:[%s409] ss:$9 sm:$0xff] %v349
        %494 = vst [vmem:[%s411] ss:$9 sm:$0xff] %v350
        %495 = vst [vmem:[%s413] ss:$9 sm:$0xff] %v351
        %v496 = vld [vmem:[#allocation1] sm:$0xff]
        %497 = vst [vmem:[#allocation1] ss:$9 sm:$0xff] %v352
        %498 = vst [vmem:[%s401] ss:$9 sm:$0xff] %v353
        %499 = vst [vmem:[%s403] ss:$9 sm:$0xff] %v354
        %500 = vst [vmem:[%s405] ss:$9 sm:$0xff] %v355
        %501 = vst [vmem:[%s407] ss:$9 sm:$0xff] %v356
        %502 = vst [vmem:[%s409] ss:$9 sm:$0xff] %v357
        %503 = vst [vmem:[%s411] ss:$9 sm:$0xff] %v358
        %504 = vst [vmem:[%s413] ss:$9 sm:$0xff] %v359
        %v505 = vld [vmem:[#allocation1] sm:$0xff]
        %506 = vst [vmem:[#allocation1] ss:$9 sm:$0xff] %v360
        %507 = vst [vmem:[%s401] ss:$9 sm:$0xff] %v361
        %508 = vst [vmem:[%s403] ss:$9 sm:$0xff] %v362
        %509 = vst [vmem:[%s405] ss:$9 sm:$0xff] %v363
        %510 = vst [vmem:[%s407] ss:$9 sm:$0xff] %v364
        %511 = vst [vmem:[%s409] ss:$9 sm:$0xff] %v365
        %512 = vst [vmem:[%s411] ss:$9 sm:$0xff] %v366
        %513 = vst [vmem:[%s413] ss:$9 sm:$0xff] %v367
        %v514 = vld [vmem:[#allocation1] sm:$0xff]
        %515 = vst [vmem:[#allocation1] ss:$9 sm:$0xff] %v368
        %516 = vst [vmem:[%s401] ss:$9 sm:$0xff] %v369
        %517 = vst [vmem:[%s403] ss:$9 sm:$0xff] %v370
        %518 = vst [vmem:[%s405] ss:$9 sm:$0xff] %v371
        %519 = vst [vmem:[%s407] ss:$9 sm:$0xff] %v372
        %520 = vst [vmem:[%s409] ss:$9 sm:$0xff] %v373
        %521 = vst [vmem:[%s411] ss:$9 sm:$0xff] %v374
        %522 = vst [vmem:[%s413] ss:$9 sm:$0xff] %v375
        %v523 = vld [vmem:[#allocation1] sm:$0xff]
        %524 = vst [vmem:[#allocation1] ss:$9 sm:$0xff] %v376
        %525 = vst [vmem:[%s401] ss:$9 sm:$0xff] %v377
        %526 = vst [vmem:[%s403] ss:$9 sm:$0xff] %v378
        %527 = vst [vmem:[%s405] ss:$9 sm:$0xff] %v379
        %528 = vst [vmem:[%s407] ss:$9 sm:$0xff] %v380
        %529 = vst [vmem:[%s409] ss:$9 sm:$0xff] %v381
        %530 = vst [vmem:[%s411] ss:$9 sm:$0xff] %v382
        %531 = vst [vmem:[%s413] ss:$9 sm:$0xff] %v383
        %v532 = vld [vmem:[#allocation1] sm:$0xff]
        %533 = vst [vmem:[#allocation1] ss:$9 sm:$0xff] %v384
        %534 = vst [vmem:[%s401] ss:$9 sm:$0xff] %v385
        %535 = vst [vmem:[%s403] ss:$9 sm:$0xff] %v386
        %536 = vst [vmem:[%s405] ss:$9 sm:$0xff] %v387
        %537 = vst [vmem:[%s407] ss:$9 sm:$0xff] %v388
        %538 = vst [vmem:[%s409] ss:$9 sm:$0xff] %v389
        %539 = vst [vmem:[%s411] ss:$9 sm:$0xff] %v390
        %540 = vst [vmem:[%s413] ss:$9 sm:$0xff] %v391
        %v541 = vld [vmem:[#allocation1] sm:$0xff]
        %542 = vst [vmem:[#allocation1] ss:$9 sm:$0xff] %v392
        %543 = vst [vmem:[%s401] ss:$9 sm:$0xff] %v393
        %544 = vst [vmem:[%s403] ss:$9 sm:$0xff] %v394
        %545 = vst [vmem:[%s405] ss:$9 sm:$0xff] %v395
        %546 = vst [vmem:[%s407] ss:$9 sm:$0xff] %v396
        %547 = vst [vmem:[%s409] ss:$9 sm:$0xff] %v397
        %548 = vst [vmem:[%s411] ss:$9 sm:$0xff] %v398
        %549 = vst [vmem:[%s413] ss:$9 sm:$0xff] %v399
        %v550 = vld [vmem:[#allocation1] sm:$0xff]
        %551 = vset.pattern.permute.xlu0 0
        %552 = vperm.xlu0 %551, %v415
        %v553 = vpop.permute.xlu0 %552
        %554 = vset.pattern.permute.xlu0 0
        %555 = vperm.xlu0 %554, %v424
        %v556 = vpop.permute.xlu0 %555
        %557 = vset.pattern.permute.xlu0 0
        %558 = vperm.xlu0 %557, %v433
        %v559 = vpop.permute.xlu0 %558
        %560 = vset.pattern.permute.xlu0 0
        %561 = vperm.xlu0 %560, %v442
        %v562 = vpop.permute.xlu0 %561
        %563 = vset.pattern.permute.xlu0 0
        %564 = vperm.xlu0 %563, %v451
        %v565 = vpop.permute.xlu0 %564
        %566 = vset.pattern.permute.xlu0 0
        %567 = vperm.xlu0 %566, %v460
        %v568 = vpop.permute.xlu0 %567
        %569 = vset.pattern.permute.xlu0 0
        %570 = vperm.xlu0 %569, %v469
        %v571 = vpop.permute.xlu0 %570
        %572 = vset.pattern.permute.xlu0 0
        %573 = vperm.xlu0 %572, %v478
        %v574 = vpop.permute.xlu0 %573
        %575 = vset.pattern.permute.xlu0 0
        %576 = vperm.xlu0 %575, %v487
        %v577 = vpop.permute.xlu0 %576
        %578 = vset.pattern.permute.xlu0 0
        %579 = vperm.xlu0 %578, %v496
        %v580 = vpop.permute.xlu0 %579
        %581 = vset.pattern.permute.xlu0 0
        %582 = vperm.xlu0 %581, %v505
        %v583 = vpop.permute.xlu0 %582
        %584 = vset.pattern.permute.xlu0 0
        %585 = vperm.xlu0 %584, %v514
        %v586 = vpop.permute.xlu0 %585
        %587 = vset.pattern.permute.xlu0 0
        %588 = vperm.xlu0 %587, %v523
        %v589 = vpop.permute.xlu0 %588
        %590 = vset.pattern.permute.xlu0 0
        %591 = vperm.xlu0 %590, %v532
        %v592 = vpop.permute.xlu0 %591
        %593 = vset.pattern.permute.xlu0 0
        %594 = vperm.xlu0 %593, %v541
        %v595 = vpop.permute.xlu0 %594
        %596 = vset.pattern.permute.xlu0 0
        %597 = vperm.xlu0 %596, %v550
        %v598 = vpop.permute.xlu0 %597
        %v599 = vlaneseq
        %v600 = vand.u32 %v599, 127
        %v601 = vperm.slane %v553, %v600
        %v602 = vadd.s32 %v600, 4294967288
        %v603 = vperm.slane %v556, %v602
        %vm604 = vcmask 130112
        %v605 = vsel %vm604, %v603, %v601
        %v606 = vadd.s32 %v600, 4294967280
        %v607 = vperm.slane %v559, %v606
        %vm608 = vcmask 195712
        %v609 = vsel %vm608, %v607, %v605
        %v610 = vadd.s32 %v600, 4294967272
        %v611 = vperm.slane %v562, %v610
        %vm612 = vcmask 261312
        %v613 = vsel %vm612, %v611, %v609
        %v614 = vadd.s32 %v600, 4294967264
        %v615 = vperm.slane %v565, %v614
        %vm616 = vcmask 326912
        %v617 = vsel %vm616, %v615, %v613
        %v618 = vadd.s32 %v600, 4294967256
        %v619 = vperm.slane %v568, %v618
        %vm620 = vcmask 392512
        %v621 = vsel %vm620, %v619, %v617
        %v622 = vadd.s32 %v600, 4294967248
        %v623 = vperm.slane %v571, %v622
        %vm624 = vcmask 458112
        %v625 = vsel %vm624, %v623, %v621
        %v626 = vadd.s32 %v600, 4294967240
        %v627 = vperm.slane %v574, %v626
        %vm628 = vcmask 523712
        %v629 = vsel %vm628, %v627, %v625
        %v630 = vadd.s32 %v600, 4294967232
        %v631 = vperm.slane %v577, %v630
        %vm632 = vcmask 589312
        %v633 = vsel %vm632, %v631, %v629
        %v634 = vadd.s32 %v600, 4294967224
        %v635 = vperm.slane %v580, %v634
        %vm636 = vcmask 654912
        %v637 = vsel %vm636, %v635, %v633
        %v638 = vadd.s32 %v600, 4294967216
        %v639 = vperm.slane %v583, %v638
        %vm640 = vcmask 720512
        %v641 = vsel %vm640, %v639, %v637
        %v642 = vadd.s32 %v600, 4294967208
        %v643 = vperm.slane %v586, %v642
        %vm644 = vcmask 786112
        %v645 = vsel %vm644, %v643, %v641
        %v646 = vadd.s32 %v600, 4294967200
        %v647 = vperm.slane %v589, %v646
        %vm648 = vcmask 851712
        %v649 = vsel %vm648, %v647, %v645
        %v650 = vadd.s32 %v600, 4294967192
        %v651 = vperm.slane %v592, %v650
        %vm652 = vcmask 917312
        %v653 = vsel %vm652, %v651, %v649
        %v654 = vadd.s32 %v600, 4294967184
        %v655 = vperm.slane %v595, %v654
        %vm656 = vcmask 982912
        %v657 = vsel %vm656, %v655, %v653
        %v658 = vadd.s32 %v600, 4294967176
        %v659 = vperm.slane %v598, %v658
        %vm660 = vcmask 1048512
        %v661 = vsel %vm660, %v659, %v657
        %v663 = vmax.f32 %v255, %v661
        %664 = vst [vmem:[%s166] sm:$0x1] %v663
        %s665 = sand.u32 %s79, 1
        %s666 = scalar_lea.sflag [#allocation4], %s665
        %s667 = sand.u32 %s79, 1
        %s668 = scalar_lea.vmem [#allocation5], %s667
        // Predicated region
        $region33: #{tpu_custom_call.1} parent=23 // pred_check
          %p669 = pneg %p89
        $region34: #{tpu_custom_call.1} parent=23 // pred_check_branch
          %671 = sbr.rel (%p669) target = $region36
        $region35: #{tpu_custom_call.1} parent=23 // pred_region
          %673 = vsyncadd %s666, 0
          %s674 = smul.addr %s23, 2
          %s675 = sadd.s32 %s24, %s674
          %s676 = scalar_lea.hbm %s1, %s675
          %s678 = sshll.u32 %s668, 4
          %s679 = int_to_ptr.vmem [resolvable:$true] %s678
          %s680 = sshll.u32 %s676, 4
          %s681 = int_to_ptr.hbm [resolvable:$true] %s680
          %683 = dma.vmem_to_hbm [thread:$0]  %s679, 16, %s681, %s666
        $region36: #{tpu_custom_call.1} parent=23 // pred_fallthru
          _
      $region24: #{tpu_custom_call.1} parent=5 // pred_fallthru
        _
      %p684 = scmp.le.s32.totalorder 2, %s13
      // Predicated region
      $region37: #{tpu_custom_call.1} parent=5 // pred_check
        %p685 = pneg %p684
      $region38: #{tpu_custom_call.1} parent=5 // pred_check_branch
        %687 = sbr.rel (%p685) target = $region40
      $region39: #{tpu_custom_call.1} parent=5 // pred_region
        %s688 = ssub.s32 %s13, 2
        // Predicated region
        $region41: #{tpu_custom_call.1} parent=39 // pred_check
          %p689 = pneg %p95
        $region42: #{tpu_custom_call.1} parent=39 // pred_check_branch
          %691 = sbr.rel (%p689) target = $region44
        $region43: #{tpu_custom_call.1} parent=39 // pred_region
          %s692 = sand.u32 %s80, 1
          %s693 = scalar_lea.sflag [#allocation4], %s692
          %s694 = sand.u32 %s80, 1
          %s695 = scalar_lea.vmem [#allocation5], %s694
          %697 = dma.done %s693, 16
        $region44: #{tpu_custom_call.1} parent=39 // pred_fallthru
          _
      $region40: #{tpu_custom_call.1} parent=5 // pred_fallthru
        _
    $region6: #{tpu_custom_call.1} parent=1 // loop_footer
      %s17 = sadd.s32 1, %s13
    $region7: #{tpu_custom_call.1} parent=1 // loop_footer_branch
      %12 = sbr.rel target = $region3
    $region8: #{tpu_custom_call.1} parent=1 // loop_exit
      _
    %698 = vsyncpa [#allocation3], 1
    %s699 = scalar_lea.sflag [#allocation3], 1
    %700 = vsyncpa %s699, 1
    %701 = vsyncpa [#allocation4], 1
    %s702 = scalar_lea.sflag [#allocation4], 1
    %703 = vsyncpa %s702, 1

</llo_original>
